<compile_context>
chip_gen: v5e
topology: v5e:2x2
jax: 0.10.0
libtpu: 0.0.40
codegen_flags: <defaults>
</compile_context>

<pallas_src>
import jax
import jax.numpy as jnp
from jax.experimental import pallas as pl
from jax.experimental.pallas import tpu as pltpu


def _round_up(n: int, m: int) -> int:
    return ((n + m - 1) // m) * m


def _pick_batch_tile(b_p: int) -> int:
    """Largest multiple-of-8 tile dividing b_p, capped at 256 (512 for huge B),
    preferring >=2 grid steps so v7x's second TensorCore gets work."""
    cap = 512 if b_p >= 1024 else 256
    best = 8
    for tb in range(8, min(cap, b_p) + 1, 8):
        if b_p % tb:
            continue
        if b_p > 8 and b_p // tb < 2:
            continue
        best = tb
    return best


def two_layer_fc_action_kernel(x_ref, a_ref, w1_ref, b1_ref, w2_ref, b2_ref,
                               out_ref):
    # Layer 1: h1 = relu(x @ W1^T + b1).  bf16 MXU matmul, f32 accumulation.
    h1 = jnp.dot(x_ref[...], w1_ref[...], preferred_element_type=jnp.float32)
    h1 = jnp.maximum(h1 + b1_ref[...], 0.0)

    # torch.cat([h1, action], dim=1) with no layout shuffle: h1's lanes
    # [H1, H1cat_p) are exactly zero and a_ref carries action in lanes
    # [H1, H1+A), so a single add merges them.
    h1_cat = (h1 + a_ref[...].astype(jnp.float32)).astype(jnp.bfloat16)

    # Layer 2: phi = relu(h1_cat @ W2cat + b2) -- one MXU matmul (W2's action
    # columns were folded into W2cat's rows [H1, H1+A) by the wrapper).
    z = jnp.dot(h1_cat, w2_ref[...], preferred_element_type=jnp.float32)
    out_ref[...] = jnp.maximum(z + b2_ref[...], 0.0)


def two_layer_fc_body_with_action_forward(x, action, params):
    """Mirrors TwoLayerFCBodyWithAction.forward(x, action) with gate=relu."""
    w1 = params["w1"]        # (H1, S)      -- PyTorch nn.Linear layout
    b1 = params["b1"]        # (H1,)
    w2 = params["w2"]        # (H2, H1 + A)
    b2 = params["b2"]        # (H2,)

    B, S = x.shape
    A = action.shape[1]
    H1 = w1.shape[0]
    H2 = w2.shape[0]

    f32 = jnp.float32
    bf16 = jnp.bfloat16

    # Sublane/lane-aligned padded sizes.  H1c_p covers the concatenated
    # [h1, action] feature axis so action always fits in h1's zero padding.
    B_p = _round_up(B, 8)
    TB = _pick_batch_tile(B_p)
    S_p = _round_up(S, 128)
    H1c_p = _round_up(H1 + A, 128)
    H2_p = _round_up(H2, 128)

    def pad2(arr, rows, cols, dtype):
        arr = arr.astype(f32)
        out = jnp.zeros((rows, cols), f32)
        out = out.at[:arr.shape[0], :arr.shape[1]].set(arr)
        return out.astype(dtype)

    # One-time wrapper-side layout work (tiny next to the matmuls).
    x_p = pad2(x, B_p, S_p, bf16)                                 # (B_p, S_p)
    # action scattered into columns [H1, H1+A) of the concat feature axis.
    a_sh = jnp.zeros((B_p, H1c_p), f32).at[:B, H1:H1 + A].set(
        action.astype(f32)).astype(bf16)                          # (B_p, H1c_p)
    w1_t = pad2(w1.T, S_p, H1c_p, bf16)                           # (S_p, H1c_p)
    b1_p = pad2(b1[None, :], 1, H1c_p, f32)                       # (1, H1c_p)
    # W2 pre-transposed, action columns folded into rows [H1, H1+A).
    w2cat = jnp.zeros((H1c_p, H2_p), f32)
    w2cat = w2cat.at[:H1, :H2].set(w2[:, :H1].T.astype(f32))
    w2cat = w2cat.at[H1:H1 + A, :H2].set(w2[:, H1:].T.astype(f32))
    w2cat = w2cat.astype(bf16)                                    # (H1c_p, H2_p)
    b2_p = pad2(b2[None, :], 1, H2_p, f32)                        # (1, H2_p)

    # VMEM budget: worst-case double-buffered footprint + headroom,
    # clamped to [32 MiB, 64 MiB] (64 MiB = v7x physical).
    w_bytes = 2 * (S_p * H1c_p + H1c_p * H2_p) + 4 * 8 * (H1c_p + H2_p)
    stream_bytes = TB * (2 * S_p + 2 * H1c_p + 4 * H2_p)
    vmem_limit = int(min(64 << 20,
                         max(32 << 20,
                             2 * (w_bytes + stream_bytes) + (8 << 20))))

    def _call(weight_mode):
        def wspec(shape):
            if weight_mode is None:
                return pl.BlockSpec(shape, lambda i: (0, 0))
            return pl.BlockSpec(shape, lambda i: (0, 0),
                                pipeline_mode=weight_mode)

        return pl.pallas_call(
            two_layer_fc_action_kernel,
            out_shape=jax.ShapeDtypeStruct((B_p, H2_p), f32),
            grid_spec=pltpu.PrefetchScalarGridSpec(
                num_scalar_prefetch=0,
                grid=(B_p // TB,),
                in_specs=[
                    pl.BlockSpec((TB, S_p), lambda i: (i, 0)),     # x
                    pl.BlockSpec((TB, H1c_p), lambda i: (i, 0)),   # shifted action
                    wspec((S_p, H1c_p)),                           # W1^T
                    wspec((1, H1c_p)),                             # b1
                    wspec((H1c_p, H2_p)),                          # W2cat
                    wspec((1, H2_p)),                              # b2
                ],
                out_specs=pl.BlockSpec((TB, H2_p), lambda i: (i, 0)),
            ),
            compiler_params=pltpu.CompilerParams(
                dimension_semantics=("parallel",),
                vmem_limit_bytes=vmem_limit),
        )(x_p, a_sh, w1_t, b1_p, w2cat, b2_p)

    try:
        # Grid-invariant weights: single-buffer (constant index map, so a
        # second buffer is pure VMEM waste).
        out_p = jax.block_until_ready(_call(pl.Buffered(1)))
    except Exception:
        # Fallback for Pallas builds that reject single-buffered BlockSpecs.
        out_p = _call(None)

    return out_p[:B, :H2]


def _reference_forward(x, action, params):
    """Pure-JAX f32 reference of the PyTorch forward (for verification)."""
    h1 = jnp.maximum(x @ params["w1"].T + params["b1"], 0.0)
    cat = jnp.concatenate([h1, action], axis=1)
    return jnp.maximum(cat @ params["w2"].T + params["b2"], 0.0)


def make_params(key, state_dim, action_dim, hidden_units):
    h1, h2 = hidden_units
    k_w1, k_b1, k_w2, k_b2 = jax.random.split(key, 4)

    def u(k, shape, fan_in):
        bound = 1.0 / (fan_in ** 0.5)
        return jax.random.uniform(k, shape, jnp.float32, -bound, bound)

    return {
        "w1": u(k_w1, (h1, state_dim), state_dim),
        "b1": u(k_b1, (h1,), state_dim),
        "w2": u(k_w2, (h2, h1 + action_dim), h1 + action_dim),
        "b2": u(k_b2, (h2,), h1 + action_dim),
    }


if __name__ == "__main__":
    STATE_DIM, ACTION_DIM = 16, 4
    HIDDEN_UNITS = (64, 64)
    B = 2

    key = jax.random.PRNGKey(0)
    k_params, k_x, k_a = jax.random.split(key, 3)

    params = make_params(k_params, STATE_DIM, ACTION_DIM, HIDDEN_UNITS)
    x = jax.random.normal(k_x, (B, STATE_DIM), jnp.float32)
    action = jax.random.normal(k_a, (B, ACTION_DIM), jnp.float32)

    phi = two_layer_fc_body_with_action_forward(x, action, params)
    phi = jax.block_until_ready(phi)

    ref = _reference_forward(x, action, params)
    assert phi.shape == (B, HIDDEN_UNITS[1])
    # bf16 MXU operands vs. f32 reference -> loosened tolerance.
    assert jnp.allclose(phi, ref, atol=5e-2, rtol=5e-2), (
        float(jnp.max(jnp.abs(phi - ref))))

    print("KERNEL_OK")
</pallas_src>

<mosaic_0001>
module attributes {stable_mosaic.version = 11 : i64} {
  func.func @two_layer_fc_action_kernel(%arg0: i32, %arg1: memref<8x128xbf16, #tpu.memory_space<vmem>>, %arg2: memref<8x128xbf16, #tpu.memory_space<vmem>>, %arg3: memref<128x128xbf16, #tpu.memory_space<vmem>>, %arg4: memref<1x128xf32, #tpu.memory_space<vmem>>, %arg5: memref<128x128xbf16, #tpu.memory_space<vmem>>, %arg6: memref<1x128xf32, #tpu.memory_space<vmem>>, %arg7: memref<8x128xf32, #tpu.memory_space<vmem>>) attributes {dimension_semantics = [#tpu.dimension_semantics<parallel>], iteration_bounds = array<i64: 1>, scalar_prefetch = 0 : i64, scratch_operands = 0 : i64, tpu.core_type = #tpu.core_type<tc>, window_params = [{transform_indices = @transform_0, window_bounds = array<i64: 8, 128>}, {transform_indices = @transform_1, window_bounds = array<i64: 8, 128>}, {pipeline_mode = #tpu.pipeline_mode<synchronous>, transform_indices = @transform_2, window_bounds = array<i64: 128, 128>}, {pipeline_mode = #tpu.pipeline_mode<synchronous>, transform_indices = @transform_3, window_bounds = array<i64: 1, 128>}, {pipeline_mode = #tpu.pipeline_mode<synchronous>, transform_indices = @transform_4, window_bounds = array<i64: 128, 128>}, {pipeline_mode = #tpu.pipeline_mode<synchronous>, transform_indices = @transform_5, window_bounds = array<i64: 1, 128>}, {transform_indices = @transform_6, window_bounds = array<i64: 8, 128>}]} {
    %c0 = arith.constant 0 : index
    %c0_0 = arith.constant 0 : index
    %0 = vector.load %arg1[%c0, %c0_0] : memref<8x128xbf16, #tpu.memory_space<vmem>>, vector<8x128xbf16>
    %c0_1 = arith.constant 0 : index
    %c0_2 = arith.constant 0 : index
    %1 = vector.load %arg3[%c0_1, %c0_2] : memref<128x128xbf16, #tpu.memory_space<vmem>>, vector<128x128xbf16>
    %cst = arith.constant dense<0.000000e+00> : vector<8x128xf32>
    %2 = tpu.matmul %0, %1, %cst {dimension_numbers = #tpu.dot_dimension_numbers<[1], [0], [0], [1], [0, 0, 1, 1], [], []>} : vector<8x128xbf16>, vector<128x128xbf16>, vector<8x128xf32> -> vector<8x128xf32>
    %c0_3 = arith.constant 0 : index
    %c0_4 = arith.constant 0 : index
    %3 = vector.load %arg4[%c0_3, %c0_4] : memref<1x128xf32, #tpu.memory_space<vmem>>, vector<1x128xf32>
    %4 = vector.broadcast %3 : vector<1x128xf32> to vector<8x128xf32>
    %5 = arith.addf %2, %4 : vector<8x128xf32>
    %cst_5 = arith.constant 0.000000e+00 : f32
    %6 = vector.broadcast %cst_5 : f32 to vector<8x128xf32>
    %7 = arith.maximumf %5, %6 : vector<8x128xf32>
    %c0_6 = arith.constant 0 : index
    %c0_7 = arith.constant 0 : index
    %8 = vector.load %arg2[%c0_6, %c0_7] : memref<8x128xbf16, #tpu.memory_space<vmem>>, vector<8x128xbf16>
    %9 = arith.extf %8 : vector<8x128xbf16> to vector<8x128xf32>
    %10 = arith.addf %7, %9 : vector<8x128xf32>
    %11 = arith.truncf %10 : vector<8x128xf32> to vector<8x128xbf16>
    %c0_8 = arith.constant 0 : index
    %c0_9 = arith.constant 0 : index
    %12 = vector.load %arg5[%c0_8, %c0_9] : memref<128x128xbf16, #tpu.memory_space<vmem>>, vector<128x128xbf16>
    %cst_10 = arith.constant dense<0.000000e+00> : vector<8x128xf32>
    %13 = tpu.matmul %11, %12, %cst_10 {dimension_numbers = #tpu.dot_dimension_numbers<[1], [0], [0], [1], [0, 0, 1, 1], [], []>} : vector<8x128xbf16>, vector<128x128xbf16>, vector<8x128xf32> -> vector<8x128xf32>
    %c0_11 = arith.constant 0 : index
    %c0_12 = arith.constant 0 : index
    %14 = vector.load %arg6[%c0_11, %c0_12] : memref<1x128xf32, #tpu.memory_space<vmem>>, vector<1x128xf32>
    %15 = vector.broadcast %14 : vector<1x128xf32> to vector<8x128xf32>
    %16 = arith.addf %13, %15 : vector<8x128xf32>
    %cst_13 = arith.constant 0.000000e+00 : f32
    %17 = vector.broadcast %cst_13 : f32 to vector<8x128xf32>
    %18 = arith.maximumf %16, %17 : vector<8x128xf32>
    %c0_14 = arith.constant 0 : index
    %c0_15 = arith.constant 0 : index
    %19 = vector.load %arg7[%c0_14, %c0_15] : memref<8x128xf32, #tpu.memory_space<vmem>>, vector<8x128xf32>
    tpu.vector_store %arg7[%c0_14, %c0_15], %18 {strides = array<i32>} : memref<8x128xf32, #tpu.memory_space<vmem>>, vector<8x128xf32>,
    return
  }
  func.func @transform_0(%arg0: i32) -> (i32, i32) {
    %c0_i32 = arith.constant 0 : i32
    %c0_i32_0 = arith.constant 0 : i32
    return %arg0, %c0_i32 : i32, i32
  }
  func.func @transform_1(%arg0: i32) -> (i32, i32) {
    %c0_i32 = arith.constant 0 : i32
    %c0_i32_0 = arith.constant 0 : i32
    return %arg0, %c0_i32 : i32, i32
  }
  func.func @transform_2(%arg0: i32) -> (i32, i32) {
    %c0_i32 = arith.constant 0 : i32
    %c0_i32_0 = arith.constant 0 : i32
    %c0_i32_1 = arith.constant 0 : i32
    return %c0_i32, %c0_i32_0 : i32, i32
  }
  func.func @transform_3(%arg0: i32) -> (i32, i32) {
    %c0_i32 = arith.constant 0 : i32
    %c0_i32_0 = arith.constant 0 : i32
    %c0_i32_1 = arith.constant 0 : i32
    return %c0_i32, %c0_i32_0 : i32, i32
  }
  func.func @transform_4(%arg0: i32) -> (i32, i32) {
    %c0_i32 = arith.constant 0 : i32
    %c0_i32_0 = arith.constant 0 : i32
    %c0_i32_1 = arith.constant 0 : i32
    return %c0_i32, %c0_i32_0 : i32, i32
  }
  func.func @transform_5(%arg0: i32) -> (i32, i32) {
    %c0_i32 = arith.constant 0 : i32
    %c0_i32_0 = arith.constant 0 : i32
    %c0_i32_1 = arith.constant 0 : i32
    return %c0_i32, %c0_i32_0 : i32, i32
  }
  func.func @transform_6(%arg0: i32) -> (i32, i32) {
    %c0_i32 = arith.constant 0 : i32
    %c0_i32_0 = arith.constant 0 : i32
    return %arg0, %c0_i32 : i32, i32
  }
}

module attributes {stable_mosaic.version = 11 : i64} {
  func.func @two_layer_fc_action_kernel(%arg0: i32, %arg1: memref<8x128xbf16, #tpu.memory_space<vmem>>, %arg2: memref<8x128xbf16, #tpu.memory_space<vmem>>, %arg3: memref<128x128xbf16, #tpu.memory_space<vmem>>, %arg4: memref<1x128xf32, #tpu.memory_space<vmem>>, %arg5: memref<128x128xbf16, #tpu.memory_space<vmem>>, %arg6: memref<1x128xf32, #tpu.memory_space<vmem>>, %arg7: memref<8x128xf32, #tpu.memory_space<vmem>>) attributes {dimension_semantics = [#tpu.dimension_semantics<parallel>], iteration_bounds = array<i64: 1>, scalar_prefetch = 0 : i64, scratch_operands = 0 : i64, tpu.core_type = #tpu.core_type<tc>, window_params = [{transform_indices = @transform_0, window_bounds = array<i64: 8, 128>}, {transform_indices = @transform_1, window_bounds = array<i64: 8, 128>}, {pipeline_mode = #tpu.pipeline_mode<synchronous>, transform_indices = @transform_2, window_bounds = array<i64: 128, 128>}, {pipeline_mode = #tpu.pipeline_mode<synchronous>, transform_indices = @transform_3, window_bounds = array<i64: 1, 128>}, {pipeline_mode = #tpu.pipeline_mode<synchronous>, transform_indices = @transform_4, window_bounds = array<i64: 128, 128>}, {pipeline_mode = #tpu.pipeline_mode<synchronous>, transform_indices = @transform_5, window_bounds = array<i64: 1, 128>}, {transform_indices = @transform_6, window_bounds = array<i64: 8, 128>}]} {
    %c0 = arith.constant 0 : index
    %c0_0 = arith.constant 0 : index
    %0 = vector.load %arg1[%c0, %c0_0] : memref<8x128xbf16, #tpu.memory_space<vmem>>, vector<8x128xbf16>
    %c0_1 = arith.constant 0 : index
    %c0_2 = arith.constant 0 : index
    %1 = vector.load %arg3[%c0_1, %c0_2] : memref<128x128xbf16, #tpu.memory_space<vmem>>, vector<128x128xbf16>
    %cst = arith.constant dense<0.000000e+00> : vector<8x128xf32>
    %2 = tpu.matmul %0, %1, %cst {dimension_numbers = #tpu.dot_dimension_numbers<[1], [0], [0], [1], [0, 0, 1, 1], [], []>} : vector<8x128xbf16>, vector<128x128xbf16>, vector<8x128xf32> -> vector<8x128xf32>
    %c0_3 = arith.constant 0 : index
    %c0_4 = arith.constant 0 : index
    %3 = vector.load %arg4[%c0_3, %c0_4] : memref<1x128xf32, #tpu.memory_space<vmem>>, vector<1x128xf32>
    %4 = vector.broadcast %3 : vector<1x128xf32> to vector<8x128xf32>
    %5 = arith.addf %2, %4 : vector<8x128xf32>
    %cst_5 = arith.constant 0.000000e+00 : f32
    %6 = vector.broadcast %cst_5 : f32 to vector<8x128xf32>
    %7 = arith.maximumf %5, %6 : vector<8x128xf32>
    %c0_6 = arith.constant 0 : index
    %c0_7 = arith.constant 0 : index
    %8 = vector.load %arg2[%c0_6, %c0_7] : memref<8x128xbf16, #tpu.memory_space<vmem>>, vector<8x128xbf16>
    %9 = arith.extf %8 : vector<8x128xbf16> to vector<8x128xf32>
    %10 = arith.addf %7, %9 : vector<8x128xf32>
    %11 = arith.truncf %10 : vector<8x128xf32> to vector<8x128xbf16>
    %c0_8 = arith.constant 0 : index
    %c0_9 = arith.constant 0 : index
    %12 = vector.load %arg5[%c0_8, %c0_9] : memref<128x128xbf16, #tpu.memory_space<vmem>>, vector<128x128xbf16>
    %cst_10 = arith.constant dense<0.000000e+00> : vector<8x128xf32>
    %13 = tpu.matmul %11, %12, %cst_10 {dimension_numbers = #tpu.dot_dimension_numbers<[1], [0], [0], [1], [0, 0, 1, 1], [], []>} : vector<8x128xbf16>, vector<128x128xbf16>, vector<8x128xf32> -> vector<8x128xf32>
    %c0_11 = arith.constant 0 : index
    %c0_12 = arith.constant 0 : index
    %14 = vector.load %arg6[%c0_11, %c0_12] : memref<1x128xf32, #tpu.memory_space<vmem>>, vector<1x128xf32>
    %15 = vector.broadcast %14 : vector<1x128xf32> to vector<8x128xf32>
    %16 = arith.addf %13, %15 : vector<8x128xf32>
    %cst_13 = arith.constant 0.000000e+00 : f32
    %17 = vector.broadcast %cst_13 : f32 to vector<8x128xf32>
    %18 = arith.maximumf %16, %17 : vector<8x128xf32>
    %c0_14 = arith.constant 0 : index
    %c0_15 = arith.constant 0 : index
    %19 = vector.load %arg7[%c0_14, %c0_15] : memref<8x128xf32, #tpu.memory_space<vmem>>, vector<8x128xf32>
    tpu.vector_store %arg7[%c0_14, %c0_15], %18 {strides = array<i32>} : memref<8x128xf32, #tpu.memory_space<vmem>>, vector<8x128xf32>,
    return
  }
  func.func @transform_0(%arg0: i32) -> (i32, i32) {
    %c0_i32 = arith.constant 0 : i32
    %c0_i32_0 = arith.constant 0 : i32
    return %arg0, %c0_i32 : i32, i32
  }
  func.func @transform_1(%arg0: i32) -> (i32, i32) {
    %c0_i32 = arith.constant 0 : i32
    %c0_i32_0 = arith.constant 0 : i32
    return %arg0, %c0_i32 : i32, i32
  }
  func.func @transform_2(%arg0: i32) -> (i32, i32) {
    %c0_i32 = arith.constant 0 : i32
    %c0_i32_0 = arith.constant 0 : i32
    %c0_i32_1 = arith.constant 0 : i32
    return %c0_i32, %c0_i32_0 : i32, i32
  }
  func.func @transform_3(%arg0: i32) -> (i32, i32) {
    %c0_i32 = arith.constant 0 : i32
    %c0_i32_0 = arith.constant 0 : i32
    %c0_i32_1 = arith.constant 0 : i32
    return %c0_i32, %c0_i32_0 : i32, i32
  }
  func.func @transform_4(%arg0: i32) -> (i32, i32) {
    %c0_i32 = arith.constant 0 : i32
    %c0_i32_0 = arith.constant 0 : i32
    %c0_i32_1 = arith.constant 0 : i32
    return %c0_i32, %c0_i32_0 : i32, i32
  }
  func.func @transform_5(%arg0: i32) -> (i32, i32) {
    %c0_i32 = arith.constant 0 : i32
    %c0_i32_0 = arith.constant 0 : i32
    %c0_i32_1 = arith.constant 0 : i32
    return %c0_i32, %c0_i32_0 : i32, i32
  }
  func.func @transform_6(%arg0: i32) -> (i32, i32) {
    %c0_i32 = arith.constant 0 : i32
    %c0_i32_0 = arith.constant 0 : i32
    return %arg0, %c0_i32 : i32, i32
  }
}

</mosaic_0001>

<llo_original>
// kernel: tpu_custom_call.1
$region0: #{tpu_custom_call.1}
  #allocation0 [shape = 'u32[]', space=smem, size = 0x4, offset = 0x4, fixed_abs, tag = 'smem constant byte address 0x4 - core index']
  #allocation1 [shape = 'u32[72,128]{1,0:T(1,128)}', space=vmem, size = 0x9000, scoped, tag = 'internal scratch']
  %s0 = inlined_call_operand.hbm [shape: bf16[8,128], index: 0, kind: input, shape index: {}]
  %s1 = inlined_call_operand.hbm [shape: bf16[8,128], index: 1, kind: input, shape index: {}]
  %s2 = inlined_call_operand.hbm [shape: bf16[128,128], index: 2, kind: input, shape index: {}]
  %s3 = inlined_call_operand.vmem [shape: f32[1,128], index: 3, kind: input, shape index: {}]
  %s4 = inlined_call_operand.hbm [shape: bf16[128,128], index: 4, kind: input, shape index: {}]
  %s5 = inlined_call_operand.vmem [shape: f32[1,128], index: 5, kind: input, shape index: {}]
  %s6 = inlined_call_operand.hbm [shape: f32[8,128], index: 6, kind: output, shape index: {}]
  %s7 = sld [smem:[#allocation0]]
  $region50: #{tpu_custom_call.1} parent=0
    _
  %s9 = ssub.s32 1, %s7
  %s10 = scalar_select 0, %s9, %s7
  $region1: #{tpu_custom_call.1} parent=0
    #allocation2 [shape = 'u8[2048]{0}', space=vmem, size = 0x800, scoped, tag = 'input window, operand 0, single buffered']
    #allocation3 [shape = 's32[1]{0}', space=sflag, size = 0x4, scoped, tag = 'scoped memory for tpu_custom_call.1']
    #allocation4 [shape = 's32[1]{0}', space=sflag, size = 0x4, scoped, tag = 'scoped memory for tpu_custom_call.1']
    #allocation5 [shape = 'u8[2048]{0}', space=vmem, size = 0x800, scoped, tag = 'input window, operand 1, single buffered']
    #allocation6 [shape = 's32[1]{0}', space=sflag, size = 0x4, scoped, tag = 'scoped memory for tpu_custom_call.1']
    #allocation7 [shape = 'u8[32768]{0}', space=vmem, size = 0x8000, scoped, tag = 'input window, operand 2, single buffered']
    #allocation8 [shape = 'u8[32768]{0}', space=vmem, size = 0x8000, scoped, tag = 'input window, operand 4, single buffered']
    #allocation9 [shape = 's32[1]{0}', space=sflag, size = 0x4, scoped, tag = 'scoped memory for tpu_custom_call.1']
    #allocation10 [shape = 'u8[4096]{0}', space=vmem, size = 0x1000, scoped, tag = 'output window, operand 0, single buffered']
    %11 = vsyncpa [#allocation3], 0
    %12 = vsyncpa [#allocation6], 0
    %13 = vsyncpa [#allocation9], 0
    %14 = vsyncpa [#allocation4], 0
    // Predicated region
    $region2: #{tpu_custom_call.1} parent=1 // pred_check
      _
    $region3: #{tpu_custom_call.1} parent=1 // pred_check_branch
      %16 = sbr.rel (0) target = $region5
    $region4: #{tpu_custom_call.1} parent=1 // pred_region
      %18 = vsyncadd [#allocation3], 0
      %s20 = sshll.u32 %s0, 4
      %s21 = int_to_ptr.hbm [resolvable:$true] %s20
      %s22 = sshll.u32 [#allocation2], 4
      %s23 = int_to_ptr.vmem [resolvable:$true] %s22
      %25 = dma.hbm_to_vmem [thread:$0]  %s21, 64, %s23, [#allocation3]
    $region5: #{tpu_custom_call.1} parent=1 // pred_fallthru
      _
    // Predicated region
    $region6: #{tpu_custom_call.1} parent=1 // pred_check
      _
    $region7: #{tpu_custom_call.1} parent=1 // pred_check_branch
      %27 = sbr.rel (0) target = $region9
    $region8: #{tpu_custom_call.1} parent=1 // pred_region
      %29 = vsyncadd [#allocation6], 0
      %s31 = sshll.u32 %s1, 4
      %s32 = int_to_ptr.hbm [resolvable:$true] %s31
      %s33 = sshll.u32 [#allocation5], 4
      %s34 = int_to_ptr.vmem [resolvable:$true] %s33
      %36 = dma.hbm_to_vmem [thread:$0]  %s32, 64, %s34, [#allocation6]
    $region9: #{tpu_custom_call.1} parent=1 // pred_fallthru
      _
    // Predicated region
    $region10: #{tpu_custom_call.1} parent=1 // pred_check
      _
    $region11: #{tpu_custom_call.1} parent=1 // pred_check_branch
      %38 = sbr.rel (0) target = $region13
    $region12: #{tpu_custom_call.1} parent=1 // pred_region
      %40 = vsyncadd [#allocation6], 0
      %s41 = sshll.u32 %s2, 4
      %s42 = int_to_ptr.hbm [resolvable:$true] %s41
      %s43 = sshll.u32 [#allocation7], 4
      %s44 = int_to_ptr.vmem [resolvable:$true] %s43
      %49 = dma.hbm_to_vmem [thread:$0]  %s42, 1024, %s44, [#allocation6], 64, 64, 4
    $region13: #{tpu_custom_call.1} parent=1 // pred_fallthru
      _
    // Predicated region
    $region14: #{tpu_custom_call.1} parent=1 // pred_check
      _
    $region15: #{tpu_custom_call.1} parent=1 // pred_check_branch
      %51 = sbr.rel (0) target = $region17
    $region16: #{tpu_custom_call.1} parent=1 // pred_region
      _
    $region17: #{tpu_custom_call.1} parent=1 // pred_fallthru
      _
    // Predicated region
    $region18: #{tpu_custom_call.1} parent=1 // pred_check
      _
    $region19: #{tpu_custom_call.1} parent=1 // pred_check_branch
      %53 = sbr.rel (0) target = $region21
    $region20: #{tpu_custom_call.1} parent=1 // pred_region
      %55 = vsyncadd [#allocation9], 0
      %s56 = sshll.u32 %s4, 4
      %s57 = int_to_ptr.hbm [resolvable:$true] %s56
      %s58 = sshll.u32 [#allocation8], 4
      %s59 = int_to_ptr.vmem [resolvable:$true] %s58
      %64 = dma.hbm_to_vmem [thread:$0]  %s57, 1024, %s59, [#allocation9], 64, 64, 4
    $region21: #{tpu_custom_call.1} parent=1 // pred_fallthru
      _
    // Predicated region
    $region22: #{tpu_custom_call.1} parent=1 // pred_check
      _
    $region23: #{tpu_custom_call.1} parent=1 // pred_check_branch
      %66 = sbr.rel (0) target = $region25
    $region24: #{tpu_custom_call.1} parent=1 // pred_region
      _
    $region25: #{tpu_custom_call.1} parent=1 // pred_fallthru
      _
    // Predicated region
    $region26: #{tpu_custom_call.1} parent=1 // pred_check
      _
    $region27: #{tpu_custom_call.1} parent=1 // pred_check_branch
      %68 = sbr.rel (0) target = $region29
    $region28: #{tpu_custom_call.1} parent=1 // pred_region
      %70 = dma.done [#allocation3], 64
    $region29: #{tpu_custom_call.1} parent=1 // pred_fallthru
      _
    // Predicated region
    $region30: #{tpu_custom_call.1} parent=1 // pred_check
      _
    $region31: #{tpu_custom_call.1} parent=1 // pred_check_branch
      %72 = sbr.rel (0) target = $region33
    $region32: #{tpu_custom_call.1} parent=1 // pred_region
      %74 = dma.done [#allocation6], 64
    $region33: #{tpu_custom_call.1} parent=1 // pred_fallthru
      _
    // Predicated region
    $region34: #{tpu_custom_call.1} parent=1 // pred_check
      _
    $region35: #{tpu_custom_call.1} parent=1 // pred_check_branch
      %76 = sbr.rel (0) target = $region37
    $region36: #{tpu_custom_call.1} parent=1 // pred_region
      %78 = dma.done [#allocation6], 1024
    $region37: #{tpu_custom_call.1} parent=1 // pred_fallthru
      _
    // Predicated region
    $region38: #{tpu_custom_call.1} parent=1 // pred_check
      _
    $region39: #{tpu_custom_call.1} parent=1 // pred_check_branch
      %80 = sbr.rel (0) target = $region41
    $region40: #{tpu_custom_call.1} parent=1 // pred_region
      %82 = dma.done [#allocation9], 1024
    $region41: #{tpu_custom_call.1} parent=1 // pred_fallthru
      _
    %v83 = vld [vmem:[#allocation2] sm:$0xf]
    %v84 = vld [vmem:[#allocation7] sm:$0xf]
    %v85 = vld [vmem:[#allocation7 + $0x4] sm:$0xf]
    %v86 = vld [vmem:[#allocation7 + $0x8] sm:$0xf]
    %v87 = vld [vmem:[#allocation7 + $0xc] sm:$0xf]
    %v88 = vld [vmem:[#allocation7 + $0x10] sm:$0xf]
    %v89 = vld [vmem:[#allocation7 + $0x14] sm:$0xf]
    %v90 = vld [vmem:[#allocation7 + $0x18] sm:$0xf]
    %v91 = vld [vmem:[#allocation7 + $0x1c] sm:$0xf]
    %v92 = vld [vmem:[#allocation7 + $0x20] sm:$0xf]
    %v93 = vld [vmem:[#allocation7 + $0x24] sm:$0xf]
    %v94 = vld [vmem:[#allocation7 + $0x28] sm:$0xf]
    %v95 = vld [vmem:[#allocation7 + $0x2c] sm:$0xf]
    %v96 = vld [vmem:[#allocation7 + $0x30] sm:$0xf]
    %v97 = vld [vmem:[#allocation7 + $0x34] sm:$0xf]
    %v98 = vld [vmem:[#allocation7 + $0x38] sm:$0xf]
    %v99 = vld [vmem:[#allocation7 + $0x3c] sm:$0xf]
    %v100 = vld [vmem:[%s3] sm:$0x1]
    %v102 = vperm.slane %v100, 0
    %v120 = vunpack.c.l.b16 %v84
    %v121 = vunpack.c.l.b16 %v85
    %v122 = vunpack.c.l.b16 %v86
    %v123 = vunpack.c.l.b16 %v87
    %v124 = vunpack.c.l.b16 %v88
    %v125 = vunpack.c.l.b16 %v89
    %v126 = vunpack.c.l.b16 %v90
    %v127 = vunpack.c.l.b16 %v91
    %v128 = vunpack.c.l.b16 %v92
    %v129 = vunpack.c.l.b16 %v93
    %v130 = vunpack.c.l.b16 %v94
    %v131 = vunpack.c.l.b16 %v95
    %v132 = vunpack.c.l.b16 %v96
    %v133 = vunpack.c.l.b16 %v97
    %v134 = vunpack.c.l.b16 %v98
    %v135 = vunpack.c.l.b16 %v99
    %v136 = vpack.c.b16 %v121, %v120
    %v137 = vpack.c.b16 %v123, %v122
    %v138 = vpack.c.b16 %v125, %v124
    %v139 = vpack.c.b16 %v127, %v126
    %v140 = vpack.c.b16 %v129, %v128
    %v141 = vpack.c.b16 %v131, %v130
    %v142 = vpack.c.b16 %v133, %v132
    %v143 = vpack.c.b16 %v135, %v134
    %152 = vmatpush.bf16.msra.mxu0 %v143
    %153 = vmatpush.bf16.msra.mxu0 %v142
    %154 = vmatpush.bf16.msra.mxu0 %v141
    %155 = vmatpush.bf16.msra.mxu0 %v140
    %156 = vmatpush.bf16.msra.mxu0 %v139
    %157 = vmatpush.bf16.msra.mxu0 %v138
    %158 = vmatpush.bf16.msra.mxu0 %v137
    %159 = vmatpush.bf16.msra.mxu0 %v136
    %160 = vmatmul.bf16.gmra.mxu0 %v83
    %v161 = vpop.f32.mrf.mxu0
    %v162 = vadd.f32 %v102, %v161
    %v163 = vpop.f32.mrf.mxu0
    %164 = vdwg.mxu0
    %v165 = vmax.f32 %v162, 0.0
    %v166 = vld [vmem:[#allocation5] sm:$0xf]
    %v167 = vunpack.c.l.bf16 %v166
    %v168 = vadd.f32 %v165, %v167
    %v169 = vpack.c.bf16 %v168, %v168
    %v170 = vld [vmem:[#allocation8] sm:$0xf]
    %v171 = vld [vmem:[#allocation8 + $0x4] sm:$0xf]
    %v172 = vld [vmem:[#allocation8 + $0x8] sm:$0xf]
    %v173 = vld [vmem:[#allocation8 + $0xc] sm:$0xf]
    %v174 = vld [vmem:[#allocation8 + $0x10] sm:$0xf]
    %v175 = vld [vmem:[#allocation8 + $0x14] sm:$0xf]
    %v176 = vld [vmem:[#allocation8 + $0x18] sm:$0xf]
    %v177 = vld [vmem:[#allocation8 + $0x1c] sm:$0xf]
    %v178 = vld [vmem:[#allocation8 + $0x20] sm:$0xf]
    %v179 = vld [vmem:[#allocation8 + $0x24] sm:$0xf]
    %v180 = vld [vmem:[#allocation8 + $0x28] sm:$0xf]
    %v181 = vld [vmem:[#allocation8 + $0x2c] sm:$0xf]
    %v182 = vld [vmem:[#allocation8 + $0x30] sm:$0xf]
    %v183 = vld [vmem:[#allocation8 + $0x34] sm:$0xf]
    %v184 = vld [vmem:[#allocation8 + $0x38] sm:$0xf]
    %v185 = vld [vmem:[#allocation8 + $0x3c] sm:$0xf]
    %v186 = vld [vmem:[%s5] sm:$0x1]
    %v188 = vperm.slane %v186, 0
    %v206 = vunpack.c.l.b16 %v170
    %v207 = vunpack.c.l.b16 %v171
    %v208 = vunpack.c.l.b16 %v172
    %v209 = vunpack.c.l.b16 %v173
    %v210 = vunpack.c.l.b16 %v174
    %v211 = vunpack.c.l.b16 %v175
    %v212 = vunpack.c.l.b16 %v176
    %v213 = vunpack.c.l.b16 %v177
    %v214 = vunpack.c.l.b16 %v178
    %v215 = vunpack.c.l.b16 %v179
    %v216 = vunpack.c.l.b16 %v180
    %v217 = vunpack.c.l.b16 %v181
    %v218 = vunpack.c.l.b16 %v182
    %v219 = vunpack.c.l.b16 %v183
    %v220 = vunpack.c.l.b16 %v184
    %v221 = vunpack.c.l.b16 %v185
    %v222 = vpack.c.b16 %v207, %v206
    %v223 = vpack.c.b16 %v209, %v208
    %v224 = vpack.c.b16 %v211, %v210
    %v225 = vpack.c.b16 %v213, %v212
    %v226 = vpack.c.b16 %v215, %v214
    %v227 = vpack.c.b16 %v217, %v216
    %v228 = vpack.c.b16 %v219, %v218
    %v229 = vpack.c.b16 %v221, %v220
    %238 = vmatpush.bf16.msra.mxu0 %v229
    %239 = vmatpush.bf16.msra.mxu0 %v228
    %240 = vmatpush.bf16.msra.mxu0 %v227
    %241 = vmatpush.bf16.msra.mxu0 %v226
    %242 = vmatpush.bf16.msra.mxu0 %v225
    %243 = vmatpush.bf16.msra.mxu0 %v224
    %244 = vmatpush.bf16.msra.mxu0 %v223
    %245 = vmatpush.bf16.msra.mxu0 %v222
    %246 = vmatmul.bf16.gmra.mxu0 %v169
    %v247 = vpop.f32.mrf.mxu0
    %v248 = vadd.f32 %v188, %v247
    %v249 = vpop.f32.mrf.mxu0
    %250 = vdwg.mxu0
    %v251 = vmax.f32 %v248, 0.0
    %252 = vst [vmem:[#allocation10] sm:$0xff] %v251
    // Predicated region
    $region42: #{tpu_custom_call.1} parent=1 // pred_check
      _
    $region43: #{tpu_custom_call.1} parent=1 // pred_check_branch
      %254 = sbr.rel (0) target = $region45
    $region44: #{tpu_custom_call.1} parent=1 // pred_region
      %256 = vsyncadd [#allocation4], 0
      %s258 = sshll.u32 [#allocation10], 4
      %s259 = int_to_ptr.vmem [resolvable:$true] %s258
      %s260 = sshll.u32 %s6, 4
      %s261 = int_to_ptr.hbm [resolvable:$true] %s260
      %263 = dma.vmem_to_hbm [thread:$0]  %s259, 128, %s261, [#allocation4]
    $region45: #{tpu_custom_call.1} parent=1 // pred_fallthru
      _
    // Predicated region
    $region46: #{tpu_custom_call.1} parent=1 // pred_check
      _
    $region47: #{tpu_custom_call.1} parent=1 // pred_check_branch
      %265 = sbr.rel (0) target = $region49
    $region48: #{tpu_custom_call.1} parent=1 // pred_region
      %267 = dma.done [#allocation4], 128
    $region49: #{tpu_custom_call.1} parent=1 // pred_fallthru
      _
    %268 = vsyncpa [#allocation3], 1
    %269 = vsyncpa [#allocation6], 1
    %270 = vsyncpa [#allocation9], 1
    %271 = vsyncpa [#allocation4], 1

// kernel: tpu_custom_call.1
$region0: #{tpu_custom_call.1}
  #allocation0 [shape = 'u32[]', space=smem, size = 0x4, offset = 0x4, fixed_abs, tag = 'smem constant byte address 0x4 - core index']
  #allocation1 [shape = 'u32[72,128]{1,0:T(1,128)}', space=vmem, size = 0x9000, scoped, tag = 'internal scratch']
  %s0 = inlined_call_operand.hbm [shape: bf16[8,128], index: 0, kind: input, shape index: {}]
  %s1 = inlined_call_operand.hbm [shape: bf16[8,128], index: 1, kind: input, shape index: {}]
  %s2 = inlined_call_operand.hbm [shape: bf16[128,128], index: 2, kind: input, shape index: {}]
  %s3 = inlined_call_operand.vmem [shape: f32[1,128], index: 3, kind: input, shape index: {}]
  %s4 = inlined_call_operand.hbm [shape: bf16[128,128], index: 4, kind: input, shape index: {}]
  %s5 = inlined_call_operand.vmem [shape: f32[1,128], index: 5, kind: input, shape index: {}]
  %s6 = inlined_call_operand.hbm [shape: f32[8,128], index: 6, kind: output, shape index: {}]
  %s7 = sld [smem:[#allocation0]]
  $region50: #{tpu_custom_call.1} parent=0
    _
  %s9 = ssub.s32 1, %s7
  %s10 = scalar_select 0, %s9, %s7
  $region1: #{tpu_custom_call.1} parent=0
    #allocation2 [shape = 'u8[2048]{0}', space=vmem, size = 0x800, scoped, tag = 'input window, operand 0, single buffered']
    #allocation3 [shape = 's32[1]{0}', space=sflag, size = 0x4, scoped, tag = 'scoped memory for tpu_custom_call.1']
    #allocation4 [shape = 's32[1]{0}', space=sflag, size = 0x4, scoped, tag = 'scoped memory for tpu_custom_call.1']
    #allocation5 [shape = 'u8[2048]{0}', space=vmem, size = 0x800, scoped, tag = 'input window, operand 1, single buffered']
    #allocation6 [shape = 's32[1]{0}', space=sflag, size = 0x4, scoped, tag = 'scoped memory for tpu_custom_call.1']
    #allocation7 [shape = 'u8[32768]{0}', space=vmem, size = 0x8000, scoped, tag = 'input window, operand 2, single buffered']
    #allocation8 [shape = 'u8[32768]{0}', space=vmem, size = 0x8000, scoped, tag = 'input window, operand 4, single buffered']
    #allocation9 [shape = 's32[1]{0}', space=sflag, size = 0x4, scoped, tag = 'scoped memory for tpu_custom_call.1']
    #allocation10 [shape = 'u8[4096]{0}', space=vmem, size = 0x1000, scoped, tag = 'output window, operand 0, single buffered']
    %11 = vsyncpa [#allocation3], 0
    %12 = vsyncpa [#allocation6], 0
    %13 = vsyncpa [#allocation9], 0
    %14 = vsyncpa [#allocation4], 0
    // Predicated region
    $region2: #{tpu_custom_call.1} parent=1 // pred_check
      _
    $region3: #{tpu_custom_call.1} parent=1 // pred_check_branch
      %16 = sbr.rel (0) target = $region5
    $region4: #{tpu_custom_call.1} parent=1 // pred_region
      %18 = vsyncadd [#allocation3], 0
      %s20 = sshll.u32 %s0, 4
      %s21 = int_to_ptr.hbm [resolvable:$true] %s20
      %s22 = sshll.u32 [#allocation2], 4
      %s23 = int_to_ptr.vmem [resolvable:$true] %s22
      %25 = dma.hbm_to_vmem [thread:$0]  %s21, 64, %s23, [#allocation3]
    $region5: #{tpu_custom_call.1} parent=1 // pred_fallthru
      _
    // Predicated region
    $region6: #{tpu_custom_call.1} parent=1 // pred_check
      _
    $region7: #{tpu_custom_call.1} parent=1 // pred_check_branch
      %27 = sbr.rel (0) target = $region9
    $region8: #{tpu_custom_call.1} parent=1 // pred_region
      %29 = vsyncadd [#allocation6], 0
      %s31 = sshll.u32 %s1, 4
      %s32 = int_to_ptr.hbm [resolvable:$true] %s31
      %s33 = sshll.u32 [#allocation5], 4
      %s34 = int_to_ptr.vmem [resolvable:$true] %s33
      %36 = dma.hbm_to_vmem [thread:$0]  %s32, 64, %s34, [#allocation6]
    $region9: #{tpu_custom_call.1} parent=1 // pred_fallthru
      _
    // Predicated region
    $region10: #{tpu_custom_call.1} parent=1 // pred_check
      _
    $region11: #{tpu_custom_call.1} parent=1 // pred_check_branch
      %38 = sbr.rel (0) target = $region13
    $region12: #{tpu_custom_call.1} parent=1 // pred_region
      %40 = vsyncadd [#allocation6], 0
      %s41 = sshll.u32 %s2, 4
      %s42 = int_to_ptr.hbm [resolvable:$true] %s41
      %s43 = sshll.u32 [#allocation7], 4
      %s44 = int_to_ptr.vmem [resolvable:$true] %s43
      %49 = dma.hbm_to_vmem [thread:$0]  %s42, 1024, %s44, [#allocation6], 64, 64, 4
    $region13: #{tpu_custom_call.1} parent=1 // pred_fallthru
      _
    // Predicated region
    $region14: #{tpu_custom_call.1} parent=1 // pred_check
      _
    $region15: #{tpu_custom_call.1} parent=1 // pred_check_branch
      %51 = sbr.rel (0) target = $region17
    $region16: #{tpu_custom_call.1} parent=1 // pred_region
      _
    $region17: #{tpu_custom_call.1} parent=1 // pred_fallthru
      _
    // Predicated region
    $region18: #{tpu_custom_call.1} parent=1 // pred_check
      _
    $region19: #{tpu_custom_call.1} parent=1 // pred_check_branch
      %53 = sbr.rel (0) target = $region21
    $region20: #{tpu_custom_call.1} parent=1 // pred_region
      %55 = vsyncadd [#allocation9], 0
      %s56 = sshll.u32 %s4, 4
      %s57 = int_to_ptr.hbm [resolvable:$true] %s56
      %s58 = sshll.u32 [#allocation8], 4
      %s59 = int_to_ptr.vmem [resolvable:$true] %s58
      %64 = dma.hbm_to_vmem [thread:$0]  %s57, 1024, %s59, [#allocation9], 64, 64, 4
    $region21: #{tpu_custom_call.1} parent=1 // pred_fallthru
      _
    // Predicated region
    $region22: #{tpu_custom_call.1} parent=1 // pred_check
      _
    $region23: #{tpu_custom_call.1} parent=1 // pred_check_branch
      %66 = sbr.rel (0) target = $region25
    $region24: #{tpu_custom_call.1} parent=1 // pred_region
      _
    $region25: #{tpu_custom_call.1} parent=1 // pred_fallthru
      _
    // Predicated region
    $region26: #{tpu_custom_call.1} parent=1 // pred_check
      _
    $region27: #{tpu_custom_call.1} parent=1 // pred_check_branch
      %68 = sbr.rel (0) target = $region29
    $region28: #{tpu_custom_call.1} parent=1 // pred_region
      %70 = dma.done [#allocation3], 64
    $region29: #{tpu_custom_call.1} parent=1 // pred_fallthru
      _
    // Predicated region
    $region30: #{tpu_custom_call.1} parent=1 // pred_check
      _
    $region31: #{tpu_custom_call.1} parent=1 // pred_check_branch
      %72 = sbr.rel (0) target = $region33
    $region32: #{tpu_custom_call.1} parent=1 // pred_region
      %74 = dma.done [#allocation6], 64
    $region33: #{tpu_custom_call.1} parent=1 // pred_fallthru
      _
    // Predicated region
    $region34: #{tpu_custom_call.1} parent=1 // pred_check
      _
    $region35: #{tpu_custom_call.1} parent=1 // pred_check_branch
      %76 = sbr.rel (0) target = $region37
    $region36: #{tpu_custom_call.1} parent=1 // pred_region
      %78 = dma.done [#allocation6], 1024
    $region37: #{tpu_custom_call.1} parent=1 // pred_fallthru
      _
    // Predicated region
    $region38: #{tpu_custom_call.1} parent=1 // pred_check
      _
    $region39: #{tpu_custom_call.1} parent=1 // pred_check_branch
      %80 = sbr.rel (0) target = $region41
    $region40: #{tpu_custom_call.1} parent=1 // pred_region
      %82 = dma.done [#allocation9], 1024
    $region41: #{tpu_custom_call.1} parent=1 // pred_fallthru
      _
    %v83 = vld [vmem:[#allocation2] sm:$0xf]
    %v84 = vld [vmem:[#allocation7] sm:$0xf]
    %v85 = vld [vmem:[#allocation7 + $0x4] sm:$0xf]
    %v86 = vld [vmem:[#allocation7 + $0x8] sm:$0xf]
    %v87 = vld [vmem:[#allocation7 + $0xc] sm:$0xf]
    %v88 = vld [vmem:[#allocation7 + $0x10] sm:$0xf]
    %v89 = vld [vmem:[#allocation7 + $0x14] sm:$0xf]
    %v90 = vld [vmem:[#allocation7 + $0x18] sm:$0xf]
    %v91 = vld [vmem:[#allocation7 + $0x1c] sm:$0xf]
    %v92 = vld [vmem:[#allocation7 + $0x20] sm:$0xf]
    %v93 = vld [vmem:[#allocation7 + $0x24] sm:$0xf]
    %v94 = vld [vmem:[#allocation7 + $0x28] sm:$0xf]
    %v95 = vld [vmem:[#allocation7 + $0x2c] sm:$0xf]
    %v96 = vld [vmem:[#allocation7 + $0x30] sm:$0xf]
    %v97 = vld [vmem:[#allocation7 + $0x34] sm:$0xf]
    %v98 = vld [vmem:[#allocation7 + $0x38] sm:$0xf]
    %v99 = vld [vmem:[#allocation7 + $0x3c] sm:$0xf]
    %v100 = vld [vmem:[%s3] sm:$0x1]
    %v102 = vperm.slane %v100, 0
    %v120 = vunpack.c.l.b16 %v84
    %v121 = vunpack.c.l.b16 %v85
    %v122 = vunpack.c.l.b16 %v86
    %v123 = vunpack.c.l.b16 %v87
    %v124 = vunpack.c.l.b16 %v88
    %v125 = vunpack.c.l.b16 %v89
    %v126 = vunpack.c.l.b16 %v90
    %v127 = vunpack.c.l.b16 %v91
    %v128 = vunpack.c.l.b16 %v92
    %v129 = vunpack.c.l.b16 %v93
    %v130 = vunpack.c.l.b16 %v94
    %v131 = vunpack.c.l.b16 %v95
    %v132 = vunpack.c.l.b16 %v96
    %v133 = vunpack.c.l.b16 %v97
    %v134 = vunpack.c.l.b16 %v98
    %v135 = vunpack.c.l.b16 %v99
    %v136 = vpack.c.b16 %v121, %v120
    %v137 = vpack.c.b16 %v123, %v122
    %v138 = vpack.c.b16 %v125, %v124
    %v139 = vpack.c.b16 %v127, %v126
    %v140 = vpack.c.b16 %v129, %v128
    %v141 = vpack.c.b16 %v131, %v130
    %v142 = vpack.c.b16 %v133, %v132
    %v143 = vpack.c.b16 %v135, %v134
    %152 = vmatpush.bf16.msra.mxu0 %v143
    %153 = vmatpush.bf16.msra.mxu0 %v142
    %154 = vmatpush.bf16.msra.mxu0 %v141
    %155 = vmatpush.bf16.msra.mxu0 %v140
    %156 = vmatpush.bf16.msra.mxu0 %v139
    %157 = vmatpush.bf16.msra.mxu0 %v138
    %158 = vmatpush.bf16.msra.mxu0 %v137
    %159 = vmatpush.bf16.msra.mxu0 %v136
    %160 = vmatmul.bf16.gmra.mxu0 %v83
    %v161 = vpop.f32.mrf.mxu0
    %v162 = vadd.f32 %v102, %v161
    %v163 = vpop.f32.mrf.mxu0
    %164 = vdwg.mxu0
    %v165 = vmax.f32 %v162, 0.0
    %v166 = vld [vmem:[#allocation5] sm:$0xf]
    %v167 = vunpack.c.l.bf16 %v166
    %v168 = vadd.f32 %v165, %v167
    %v169 = vpack.c.bf16 %v168, %v168
    %v170 = vld [vmem:[#allocation8] sm:$0xf]
    %v171 = vld [vmem:[#allocation8 + $0x4] sm:$0xf]
    %v172 = vld [vmem:[#allocation8 + $0x8] sm:$0xf]
    %v173 = vld [vmem:[#allocation8 + $0xc] sm:$0xf]
    %v174 = vld [vmem:[#allocation8 + $0x10] sm:$0xf]
    %v175 = vld [vmem:[#allocation8 + $0x14] sm:$0xf]
    %v176 = vld [vmem:[#allocation8 + $0x18] sm:$0xf]
    %v177 = vld [vmem:[#allocation8 + $0x1c] sm:$0xf]
    %v178 = vld [vmem:[#allocation8 + $0x20] sm:$0xf]
    %v179 = vld [vmem:[#allocation8 + $0x24] sm:$0xf]
    %v180 = vld [vmem:[#allocation8 + $0x28] sm:$0xf]
    %v181 = vld [vmem:[#allocation8 + $0x2c] sm:$0xf]
    %v182 = vld [vmem:[#allocation8 + $0x30] sm:$0xf]
    %v183 = vld [vmem:[#allocation8 + $0x34] sm:$0xf]
    %v184 = vld [vmem:[#allocation8 + $0x38] sm:$0xf]
    %v185 = vld [vmem:[#allocation8 + $0x3c] sm:$0xf]
    %v186 = vld [vmem:[%s5] sm:$0x1]
    %v188 = vperm.slane %v186, 0
    %v206 = vunpack.c.l.b16 %v170
    %v207 = vunpack.c.l.b16 %v171
    %v208 = vunpack.c.l.b16 %v172
    %v209 = vunpack.c.l.b16 %v173
    %v210 = vunpack.c.l.b16 %v174
    %v211 = vunpack.c.l.b16 %v175
    %v212 = vunpack.c.l.b16 %v176
    %v213 = vunpack.c.l.b16 %v177
    %v214 = vunpack.c.l.b16 %v178
    %v215 = vunpack.c.l.b16 %v179
    %v216 = vunpack.c.l.b16 %v180
    %v217 = vunpack.c.l.b16 %v181
    %v218 = vunpack.c.l.b16 %v182
    %v219 = vunpack.c.l.b16 %v183
    %v220 = vunpack.c.l.b16 %v184
    %v221 = vunpack.c.l.b16 %v185
    %v222 = vpack.c.b16 %v207, %v206
    %v223 = vpack.c.b16 %v209, %v208
    %v224 = vpack.c.b16 %v211, %v210
    %v225 = vpack.c.b16 %v213, %v212
    %v226 = vpack.c.b16 %v215, %v214
    %v227 = vpack.c.b16 %v217, %v216
    %v228 = vpack.c.b16 %v219, %v218
    %v229 = vpack.c.b16 %v221, %v220
    %238 = vmatpush.bf16.msra.mxu0 %v229
    %239 = vmatpush.bf16.msra.mxu0 %v228
    %240 = vmatpush.bf16.msra.mxu0 %v227
    %241 = vmatpush.bf16.msra.mxu0 %v226
    %242 = vmatpush.bf16.msra.mxu0 %v225
    %243 = vmatpush.bf16.msra.mxu0 %v224
    %244 = vmatpush.bf16.msra.mxu0 %v223
    %245 = vmatpush.bf16.msra.mxu0 %v222
    %246 = vmatmul.bf16.gmra.mxu0 %v169
    %v247 = vpop.f32.mrf.mxu0
    %v248 = vadd.f32 %v188, %v247
    %v249 = vpop.f32.mrf.mxu0
    %250 = vdwg.mxu0
    %v251 = vmax.f32 %v248, 0.0
    %252 = vst [vmem:[#allocation10] sm:$0xff] %v251
    // Predicated region
    $region42: #{tpu_custom_call.1} parent=1 // pred_check
      _
    $region43: #{tpu_custom_call.1} parent=1 // pred_check_branch
      %254 = sbr.rel (0) target = $region45
    $region44: #{tpu_custom_call.1} parent=1 // pred_region
      %256 = vsyncadd [#allocation4], 0
      %s258 = sshll.u32 [#allocation10], 4
      %s259 = int_to_ptr.vmem [resolvable:$true] %s258
      %s260 = sshll.u32 %s6, 4
      %s261 = int_to_ptr.hbm [resolvable:$true] %s260
      %263 = dma.vmem_to_hbm [thread:$0]  %s259, 128, %s261, [#allocation4]
    $region45: #{tpu_custom_call.1} parent=1 // pred_fallthru
      _
    // Predicated region
    $region46: #{tpu_custom_call.1} parent=1 // pred_check
      _
    $region47: #{tpu_custom_call.1} parent=1 // pred_check_branch
      %265 = sbr.rel (0) target = $region49
    $region48: #{tpu_custom_call.1} parent=1 // pred_region
      %267 = dma.done [#allocation4], 128
    $region49: #{tpu_custom_call.1} parent=1 // pred_fallthru
      _
    %268 = vsyncpa [#allocation3], 1
    %269 = vsyncpa [#allocation6], 1
    %270 = vsyncpa [#allocation9], 1
    %271 = vsyncpa [#allocation4], 1

</llo_original>
